<compile_context>
chip_gen: v7x
topology: tpu7x:2x2x1
jax: 0.10.0
libtpu: 0.0.40
codegen_flags: <defaults>
</compile_context>

<pallas_src>
import jax
import jax.numpy as jnp
from jax import lax
from jax.experimental import pallas as pl
from jax.experimental.pallas import tpu as pltpu


def _weight_norm(v, g):
    """PyTorch weight_norm (default dim=0) for a Conv1d weight v: (C_out, C_in, K)."""
    norm = jnp.sqrt(jnp.sum(v * v, axis=(1, 2), keepdims=True))
    return (g.reshape(-1, 1, 1) / norm) * v


def _pick_block_batch(B, L, C_in, C_out, pad):
    """Batch-tile size: big enough to amortize grid overhead / fill the MXU, small
    enough to bound accumulator rows, fit VMEM, and keep >= 2 grid steps for v7x."""
    # rough per-batch-element VMEM footprint of the pipelined tiles (bytes)
    per_b = (pad + L) * C_in * 2 + C_out * L * 4 + (pad + L) * C_out * 4 * 2
    cap = max(1, (8 << 20) // max(per_b, 1))          # ~8 MiB of per-step tiles
    cap = min(cap, max(1, 512 // max(L, 1)))          # bound TB*L rows (vreg pressure)
    if B > 1:
        cap = min(cap, max(1, B // 2))                # >= 2 grid steps -> both v7x TCs busy
    cap = max(1, min(cap, B))
    for tb in range(cap, 0, -1):                      # largest divisor of B <= cap
        if B % tb == 0:
            return tb
    return 1


def _make_kernel(*, K, dilation, pad, L, C_in, C_out, TB, has_downsample):
    def body(x_ref, w1_ref, b1_ref, w2_ref, b2_ref, o_ref, wd_ref, bd_ref):
        xp = x_ref[...]                                         # (TB, pad+L, C_in) bf16

        # ---- conv1 (weight-normed, dilated, causal): im2col over the K taps,
        #      single deep MXU push with f32 accumulation, then bias + ReLU ----
        cols = [xp[:, k * dilation:k * dilation + L, :] for k in range(K)]
        c1 = jnp.concatenate(cols, axis=-1) if K > 1 else cols[0]
        c1 = c1.reshape(TB * L, K * C_in)
        acc = jnp.dot(c1, w1_ref[...], preferred_element_type=jnp.float32)
        h1 = jnp.maximum(acc + b1_ref[...], 0.0)                # (TB*L, C_out) f32
        # TODO(synk): dropout1 is train-only; eval-mode identity.

        # ---- conv2: left-pad the hidden in registers (no scratch, no per-step
        #      zeroing, megacore-safe), im2col, deep matmul, bias + ReLU ----
        h1b = h1.astype(jnp.bfloat16).reshape(TB, L, C_out)
        if pad > 0:
            h1p = jnp.concatenate(
                [jnp.zeros((TB, pad, C_out), jnp.bfloat16), h1b], axis=1)
        else:
            h1p = h1b
        cols2 = [h1p[:, k * dilation:k * dilation + L, :] for k in range(K)]
        c2 = jnp.concatenate(cols2, axis=-1) if K > 1 else cols2[0]
        c2 = c2.reshape(TB * L, K * C_out)
        acc2 = jnp.dot(c2, w2_ref[...], preferred_element_type=jnp.float32)
        out = jnp.maximum(acc2 + b2_ref[...], 0.0)              # (TB*L, C_out) f32
        # TODO(synk): dropout2 is train-only; eval-mode identity.

        # ---- residual branch (optional 1x1 conv downsample) + final ReLU ----
        xin = xp[:, pad:, :].reshape(TB * L, C_in)              # unpadded rows, bf16
        if has_downsample:
            res = jnp.dot(xin, wd_ref[...],
                          preferred_element_type=jnp.float32) + bd_ref[...]
        else:
            res = xin.astype(jnp.float32)
        y = jnp.maximum(out + res, 0.0)                         # (TB*L, C_out) f32

        # store directly in the module's native (B, C_out, L) layout
        # (time on lanes -> lane-dense stores when C_out < 128, no wrapper transpose)
        o_ref[...] = jnp.swapaxes(y.reshape(TB, L, C_out), 1, 2)

    if has_downsample:
        def kernel(x_ref, w1_ref, b1_ref, w2_ref, b2_ref, wd_ref, bd_ref, o_ref):
            body(x_ref, w1_ref, b1_ref, w2_ref, b2_ref, o_ref, wd_ref, bd_ref)
    else:
        def kernel(x_ref, w1_ref, b1_ref, w2_ref, b2_ref, o_ref):
            body(x_ref, w1_ref, b1_ref, w2_ref, b2_ref, o_ref, None, None)
    return kernel


def temporal_block_forward(x, params, *, kernel_size, stride, dilation, padding,
                           block_batch=None):
    """Eval-mode TemporalBlock forward.  x: (B, C_in, L) f32 -> (B, C_out, L) f32."""
    B, C_in, L = x.shape
    assert stride == 1, "TemporalBlock is used with stride=1"
    assert padding == (kernel_size - 1) * dilation, "Chomp1d requires causal padding"
    K, pad = kernel_size, padding

    # ---- weight prep (f32 weight_norm, bf16 MXU operands, taps fused for im2col) ----
    w1 = _weight_norm(params["v1"], params["g1"])               # (C_out, C_in, K) f32
    w2 = _weight_norm(params["v2"], params["g2"])               # (C_out, C_out, K) f32
    C_out = w1.shape[0]
    # feature index j = k*C_in + ci must match the im2col concat order in the kernel
    w1f = jnp.transpose(w1, (2, 1, 0)).reshape(K * C_in, C_out).astype(jnp.bfloat16)
    w2f = jnp.transpose(w2, (2, 1, 0)).reshape(K * C_out, C_out).astype(jnp.bfloat16)
    b1 = params["b1"].reshape(1, C_out).astype(jnp.float32)
    b2 = params["b2"].reshape(1, C_out).astype(jnp.float32)

    has_downsample = params.get("wd") is not None

    # ---- input prep: causal pad + time-major layout + bf16 cast in ONE fused pass
    #      (the cast is needed anyway, so the layout change costs no extra HBM trip) ----
    xp = jnp.pad(x, ((0, 0), (0, 0), (pad, 0)))                 # (B, C_in, pad+L)
    xp = jnp.transpose(xp, (0, 2, 1)).astype(jnp.bfloat16)      # (B, pad+L, C_in) bf16

    TB = block_batch if block_batch is not None else _pick_block_batch(
        B, L, C_in, C_out, pad)
    assert B % TB == 0
    grid = (B // TB,)

    in_specs = [
        pl.BlockSpec((TB, pad + L, C_in), lambda b: (b, 0, 0)),        # x tile
        pl.BlockSpec((K * C_in, C_out), lambda b: (0, 0)),             # fused conv1 W
        pl.BlockSpec((1, C_out), lambda b: (0, 0)),                    # b1
        pl.BlockSpec((K * C_out, C_out), lambda b: (0, 0)),            # fused conv2 W
        pl.BlockSpec((1, C_out), lambda b: (0, 0)),                    # b2
    ]
    args = [xp, w1f, b1, w2f, b2]
    if has_downsample:
        wd = jnp.transpose(params["wd"], (1, 0)).astype(jnp.bfloat16)  # (C_in, C_out)
        bd = params["bd"].reshape(1, C_out).astype(jnp.float32)
        in_specs += [
            pl.BlockSpec((C_in, C_out), lambda b: (0, 0)),
            pl.BlockSpec((1, C_out), lambda b: (0, 0)),
        ]
        args += [wd, bd]

    kernel = _make_kernel(K=K, dilation=dilation, pad=pad, L=L, C_in=C_in,
                          C_out=C_out, TB=TB, has_downsample=has_downsample)

    out = pl.pallas_call(
        kernel,
        out_shape=jax.ShapeDtypeStruct((B, C_out, L), jnp.float32),
        grid_spec=pltpu.PrefetchScalarGridSpec(
            num_scalar_prefetch=0,
            grid=grid,
            in_specs=in_specs,
            out_specs=pl.BlockSpec((TB, C_out, L), lambda b: (b, 0, 0)),
        ),
        compiler_params=pltpu.CompilerParams(
            dimension_semantics=("parallel",),
            # explicit cap: fits v7x's 64 MiB per-TC VMEM with headroom, harmless on
            # v5e/v6e (128 MiB); per-step tiles are kept well below this by _pick_block_batch
            vmem_limit_bytes=48 * 1024 * 1024),
    )(*args)
    return out                                                   # (B, C_out, L) f32


# -------------------- deterministic parameter construction --------------------
def make_params(key, C_in, C_out, K, has_downsample):
    ks = jax.random.split(key, 6)
    v1 = 0.01 * jax.random.normal(ks[0], (C_out, C_in, K), jnp.float32)
    g1 = jnp.sqrt(jnp.sum(v1 * v1, axis=(1, 2)))   # weight_norm init: g = ||v|| per out ch
    b1 = 0.05 * jax.random.normal(ks[1], (C_out,), jnp.float32)
    v2 = 0.01 * jax.random.normal(ks[2], (C_out, C_out, K), jnp.float32)
    g2 = jnp.sqrt(jnp.sum(v2 * v2, axis=(1, 2)))
    b2 = 0.05 * jax.random.normal(ks[3], (C_out,), jnp.float32)
    p = dict(v1=v1, g1=g1, b1=b1, v2=v2, g2=g2, b2=b2, wd=None, bd=None)
    if has_downsample:
        p["wd"] = 0.01 * jax.random.normal(ks[4], (C_out, C_in), jnp.float32)
        p["bd"] = 0.05 * jax.random.normal(ks[5], (C_out,), jnp.float32)
    return p


# -------------------- pure-JAX/XLA reference (independent path) --------------------
def ref_temporal_block(x, params, *, kernel_size, stride, dilation, padding):
    w1 = _weight_norm(params["v1"], params["g1"])
    w2 = _weight_norm(params["v2"], params["g2"])

    def causal_conv(inp, w, b):
        y = lax.conv_general_dilated(
            inp, w, window_strides=(stride,), padding=[(padding, padding)],
            rhs_dilation=(dilation,), dimension_numbers=("NCH", "OIH", "NCH"),
            precision=lax.Precision.HIGHEST)
        y = y + b[None, :, None]
        if padding > 0:
            y = y[:, :, :-padding]                               # Chomp1d
        return y

    out = jax.nn.relu(causal_conv(x, w1, params["b1"]))          # dropout1: eval identity
    out = jax.nn.relu(causal_conv(out, w2, params["b2"]))        # dropout2: eval identity
    if params.get("wd") is not None:
        res = jnp.einsum("oc,bcl->bol", params["wd"], x,
                         precision=lax.Precision.HIGHEST) + params["bd"][None, :, None]
    else:
        res = x
    return jax.nn.relu(out + res)


if __name__ == "__main__":
    key = jax.random.PRNGKey(0)
    kx, kp = jax.random.split(key)

    # small shapes consistent with the module
    B, C_in, C_out, L = 2, 4, 8, 16
    K, stride, dilation = 3, 1, 2
    padding = (K - 1) * dilation                                 # causal TCN padding = 4

    x = jax.random.normal(kx, (B, C_in, L), jnp.float32)
    params = make_params(kp, C_in, C_out, K, has_downsample=(C_in != C_out))

    out = temporal_block_forward(x, params, kernel_size=K, stride=stride,
                                 dilation=dilation, padding=padding)
    out = jax.block_until_ready(out)

    ref = ref_temporal_block(x, params, kernel_size=K, stride=stride,
                             dilation=dilation, padding=padding)
    assert out.shape == (B, C_out, L)
    # bf16 MXU operands with f32 accumulation -> relaxed tolerance vs f32 reference
    assert jnp.allclose(out, ref, atol=1e-2, rtol=1e-2), (out, ref)

    print("KERNEL_OK")
</pallas_src>

<mosaic_0001>
module attributes {stable_mosaic.version = 11 : i64} {
  func.func @kernel(%arg0: i32, %arg1: memref<1x20x4xbf16, #tpu.memory_space<vmem>>, %arg2: memref<12x8xbf16, #tpu.memory_space<vmem>>, %arg3: memref<1x8xf32, #tpu.memory_space<vmem>>, %arg4: memref<24x8xbf16, #tpu.memory_space<vmem>>, %arg5: memref<1x8xf32, #tpu.memory_space<vmem>>, %arg6: memref<4x8xbf16, #tpu.memory_space<vmem>>, %arg7: memref<1x8xf32, #tpu.memory_space<vmem>>, %arg8: memref<1x8x16xf32, #tpu.memory_space<vmem>>) attributes {dimension_semantics = [#tpu.dimension_semantics<parallel>], iteration_bounds = array<i64: 2>, scalar_prefetch = 0 : i64, scratch_operands = 0 : i64, tpu.core_type = #tpu.core_type<tc>, window_params = [{transform_indices = @transform_0, window_bounds = array<i64: 1, 20, 4>}, {pipeline_mode = #tpu.pipeline_mode<synchronous>, transform_indices = @transform_1, window_bounds = array<i64: 12, 8>}, {pipeline_mode = #tpu.pipeline_mode<synchronous>, transform_indices = @transform_2, window_bounds = array<i64: 1, 8>}, {pipeline_mode = #tpu.pipeline_mode<synchronous>, transform_indices = @transform_3, window_bounds = array<i64: 24, 8>}, {pipeline_mode = #tpu.pipeline_mode<synchronous>, transform_indices = @transform_4, window_bounds = array<i64: 1, 8>}, {pipeline_mode = #tpu.pipeline_mode<synchronous>, transform_indices = @transform_5, window_bounds = array<i64: 4, 8>}, {pipeline_mode = #tpu.pipeline_mode<synchronous>, transform_indices = @transform_6, window_bounds = array<i64: 1, 8>}, {transform_indices = @transform_7, window_bounds = array<i64: 1, 8, 16>}]} {
    %c0 = arith.constant 0 : index
    %c0_0 = arith.constant 0 : index
    %c0_1 = arith.constant 0 : index
    %0 = vector.load %arg1[%c0, %c0_0, %c0_1] : memref<1x20x4xbf16, #tpu.memory_space<vmem>>, vector<1x20x4xbf16>
    %1 = vector.extract_strided_slice %0 {offsets = [0, 0, 0], sizes = [1, 16, 4], strides = [1, 1, 1]} : vector<1x20x4xbf16> to vector<1x16x4xbf16>
    %2 = vector.extract_strided_slice %0 {offsets = [0, 2, 0], sizes = [1, 16, 4], strides = [1, 1, 1]} : vector<1x20x4xbf16> to vector<1x16x4xbf16>
    %3 = vector.extract_strided_slice %0 {offsets = [0, 4, 0], sizes = [1, 16, 4], strides = [1, 1, 1]} : vector<1x20x4xbf16> to vector<1x16x4xbf16>
    %4 = tpu.concatenate %1, %2, %3 in 2 : vector<1x16x4xbf16>, vector<1x16x4xbf16>, vector<1x16x4xbf16> -> vector<1x16x12xbf16>
    %5 = vector.shape_cast %4 : vector<1x16x12xbf16> to vector<16x12xbf16>
    %c0_2 = arith.constant 0 : index
    %c0_3 = arith.constant 0 : index
    %6 = vector.load %arg2[%c0_2, %c0_3] : memref<12x8xbf16, #tpu.memory_space<vmem>>, vector<12x8xbf16>
    %cst = arith.constant dense<0.000000e+00> : vector<16x8xf32>
    %7 = tpu.matmul %5, %6, %cst {dimension_numbers = #tpu.dot_dimension_numbers<[1], [0], [0], [1], [0, 0, 1, 1], [], []>} : vector<16x12xbf16>, vector<12x8xbf16>, vector<16x8xf32> -> vector<16x8xf32>
    %c0_4 = arith.constant 0 : index
    %c0_5 = arith.constant 0 : index
    %8 = vector.load %arg3[%c0_4, %c0_5] : memref<1x8xf32, #tpu.memory_space<vmem>>, vector<1x8xf32>
    %9 = vector.broadcast %8 : vector<1x8xf32> to vector<16x8xf32>
    %10 = arith.addf %7, %9 : vector<16x8xf32>
    %cst_6 = arith.constant 0.000000e+00 : f32
    %11 = vector.broadcast %cst_6 : f32 to vector<16x8xf32>
    %12 = arith.maximumf %10, %11 : vector<16x8xf32>
    %13 = arith.truncf %12 : vector<16x8xf32> to vector<16x8xbf16>
    %14 = vector.shape_cast %13 : vector<16x8xbf16> to vector<1x16x8xbf16>
    %cst_7 = arith.constant 0.000000e+00 : bf16
    %15 = vector.broadcast %cst_7 : bf16 to vector<1x4x8xbf16>
    %16 = tpu.concatenate %15, %14 in 1 : vector<1x4x8xbf16>, vector<1x16x8xbf16> -> vector<1x20x8xbf16>
    %17 = vector.extract_strided_slice %16 {offsets = [0, 0, 0], sizes = [1, 16, 8], strides = [1, 1, 1]} : vector<1x20x8xbf16> to vector<1x16x8xbf16>
    %18 = vector.extract_strided_slice %16 {offsets = [0, 2, 0], sizes = [1, 16, 8], strides = [1, 1, 1]} : vector<1x20x8xbf16> to vector<1x16x8xbf16>
    %19 = vector.extract_strided_slice %16 {offsets = [0, 4, 0], sizes = [1, 16, 8], strides = [1, 1, 1]} : vector<1x20x8xbf16> to vector<1x16x8xbf16>
    %20 = tpu.concatenate %17, %18, %19 in 2 : vector<1x16x8xbf16>, vector<1x16x8xbf16>, vector<1x16x8xbf16> -> vector<1x16x24xbf16>
    %21 = vector.shape_cast %20 : vector<1x16x24xbf16> to vector<16x24xbf16>
    %c0_8 = arith.constant 0 : index
    %c0_9 = arith.constant 0 : index
    %22 = vector.load %arg4[%c0_8, %c0_9] : memref<24x8xbf16, #tpu.memory_space<vmem>>, vector<24x8xbf16>
    %cst_10 = arith.constant dense<0.000000e+00> : vector<16x8xf32>
    %23 = tpu.matmul %21, %22, %cst_10 {dimension_numbers = #tpu.dot_dimension_numbers<[1], [0], [0], [1], [0, 0, 1, 1], [], []>} : vector<16x24xbf16>, vector<24x8xbf16>, vector<16x8xf32> -> vector<16x8xf32>
    %c0_11 = arith.constant 0 : index
    %c0_12 = arith.constant 0 : index
    %24 = vector.load %arg5[%c0_11, %c0_12] : memref<1x8xf32, #tpu.memory_space<vmem>>, vector<1x8xf32>
    %25 = vector.broadcast %24 : vector<1x8xf32> to vector<16x8xf32>
    %26 = arith.addf %23, %25 : vector<16x8xf32>
    %cst_13 = arith.constant 0.000000e+00 : f32
    %27 = vector.broadcast %cst_13 : f32 to vector<16x8xf32>
    %28 = arith.maximumf %26, %27 : vector<16x8xf32>
    %29 = vector.extract_strided_slice %0 {offsets = [0, 4, 0], sizes = [1, 16, 4], strides = [1, 1, 1]} : vector<1x20x4xbf16> to vector<1x16x4xbf16>
    %30 = vector.shape_cast %29 : vector<1x16x4xbf16> to vector<16x4xbf16>
    %c0_14 = arith.constant 0 : index
    %c0_15 = arith.constant 0 : index
    %31 = vector.load %arg6[%c0_14, %c0_15] : memref<4x8xbf16, #tpu.memory_space<vmem>>, vector<4x8xbf16>
    %cst_16 = arith.constant dense<0.000000e+00> : vector<16x8xf32>
    %32 = tpu.matmul %30, %31, %cst_16 {dimension_numbers = #tpu.dot_dimension_numbers<[1], [0], [0], [1], [0, 0, 1, 1], [], []>} : vector<16x4xbf16>, vector<4x8xbf16>, vector<16x8xf32> -> vector<16x8xf32>
    %c0_17 = arith.constant 0 : index
    %c0_18 = arith.constant 0 : index
    %33 = vector.load %arg7[%c0_17, %c0_18] : memref<1x8xf32, #tpu.memory_space<vmem>>, vector<1x8xf32>
    %34 = vector.broadcast %33 : vector<1x8xf32> to vector<16x8xf32>
    %35 = arith.addf %32, %34 : vector<16x8xf32>
    %36 = arith.addf %28, %35 : vector<16x8xf32>
    %cst_19 = arith.constant 0.000000e+00 : f32
    %37 = vector.broadcast %cst_19 : f32 to vector<16x8xf32>
    %38 = arith.maximumf %36, %37 : vector<16x8xf32>
    %39 = vector.shape_cast %38 : vector<16x8xf32> to vector<1x16x8xf32>
    %40 = tpu.transpose %39, [0, 2, 1] : vector<1x16x8xf32> -> vector<1x8x16xf32>
    %c0_20 = arith.constant 0 : index
    %c0_21 = arith.constant 0 : index
    %c0_22 = arith.constant 0 : index
    %41 = vector.load %arg8[%c0_20, %c0_21, %c0_22] : memref<1x8x16xf32, #tpu.memory_space<vmem>>, vector<1x8x16xf32>
    tpu.vector_store %arg8[%c0_20, %c0_21, %c0_22], %40 {strides = array<i32>} : memref<1x8x16xf32, #tpu.memory_space<vmem>>, vector<1x8x16xf32>,
    return
  }
  func.func @transform_0(%arg0: i32) -> (i32, i32, i32) {
    %c0_i32 = arith.constant 0 : i32
    %c0_i32_0 = arith.constant 0 : i32
    %c0_i32_1 = arith.constant 0 : i32
    return %arg0, %c0_i32, %c0_i32_0 : i32, i32, i32
  }
  func.func @transform_1(%arg0: i32) -> (i32, i32) {
    %c0_i32 = arith.constant 0 : i32
    %c0_i32_0 = arith.constant 0 : i32
    %c0_i32_1 = arith.constant 0 : i32
    return %c0_i32, %c0_i32_0 : i32, i32
  }
  func.func @transform_2(%arg0: i32) -> (i32, i32) {
    %c0_i32 = arith.constant 0 : i32
    %c0_i32_0 = arith.constant 0 : i32
    %c0_i32_1 = arith.constant 0 : i32
    return %c0_i32, %c0_i32_0 : i32, i32
  }
  func.func @transform_3(%arg0: i32) -> (i32, i32) {
    %c0_i32 = arith.constant 0 : i32
    %c0_i32_0 = arith.constant 0 : i32
    %c0_i32_1 = arith.constant 0 : i32
    return %c0_i32, %c0_i32_0 : i32, i32
  }
  func.func @transform_4(%arg0: i32) -> (i32, i32) {
    %c0_i32 = arith.constant 0 : i32
    %c0_i32_0 = arith.constant 0 : i32
    %c0_i32_1 = arith.constant 0 : i32
    return %c0_i32, %c0_i32_0 : i32, i32
  }
  func.func @transform_5(%arg0: i32) -> (i32, i32) {
    %c0_i32 = arith.constant 0 : i32
    %c0_i32_0 = arith.constant 0 : i32
    %c0_i32_1 = arith.constant 0 : i32
    return %c0_i32, %c0_i32_0 : i32, i32
  }
  func.func @transform_6(%arg0: i32) -> (i32, i32) {
    %c0_i32 = arith.constant 0 : i32
    %c0_i32_0 = arith.constant 0 : i32
    %c0_i32_1 = arith.constant 0 : i32
    return %c0_i32, %c0_i32_0 : i32, i32
  }
  func.func @transform_7(%arg0: i32) -> (i32, i32, i32) {
    %c0_i32 = arith.constant 0 : i32
    %c0_i32_0 = arith.constant 0 : i32
    %c0_i32_1 = arith.constant 0 : i32
    return %arg0, %c0_i32, %c0_i32_0 : i32, i32, i32
  }
}

</mosaic_0001>

<llo_original>
// kernel: tpu_custom_call.1
$region0: #{tpu_custom_call.1}
  #allocation0 [shape = 'u32[]', space=smem, size = 0x4, offset = 0x4, fixed_abs, tag = 'smem constant byte address 0x4 - core index']
  #allocation1 [shape = 'u32[144,128]{1,0:T(1,128)}', space=vmem, size = 0x12000, scoped, tag = 'internal scratch']
  %s0 = inlined_call_operand.vmem [shape: bf16[2,20,4], index: 0, kind: input, shape index: {}]
  %s1 = inlined_call_operand.vmem [shape: bf16[12,8], index: 1, kind: input, shape index: {}]
  %s2 = inlined_call_operand.vmem [shape: f32[1,8], index: 2, kind: input, shape index: {}]
  %s3 = inlined_call_operand.vmem [shape: bf16[24,8], index: 3, kind: input, shape index: {}]
  %s4 = inlined_call_operand.vmem [shape: f32[1,8], index: 4, kind: input, shape index: {}]
  %s5 = inlined_call_operand.vmem [shape: bf16[4,8], index: 5, kind: input, shape index: {}]
  %s6 = inlined_call_operand.vmem [shape: f32[1,8], index: 6, kind: input, shape index: {}]
  %s7 = inlined_call_operand.hbm [shape: f32[2,8,16], index: 7, kind: output, shape index: {}]
  %s8 = sld [smem:[#allocation0]]
  $region61: #{tpu_custom_call.1} parent=0
    _
  %s10 = ssub.s32 1, %s8
  %s11 = scalar_select 0, %s10, %s8
  $region1: #{tpu_custom_call.1} parent=0
    #allocation2 [shape = 'u8[8192]{0}', space=vmem, size = 0x2000, scoped, tag = 'output window, operand 0']
    #allocation3 [shape = 's32[2]{0}', space=sflag, size = 0x8, scoped, tag = 'scoped memory for tpu_custom_call.1']
    %12 = vsyncpa [#allocation3], 0
    %s13 = scalar_lea.sflag [#allocation3], 1
    %14 = vsyncpa %s13, 0
    loop: start=0, step=1, limit=4
    $region2: #{tpu_custom_call.1} parent=1 // loop_pre_header
      _
    $region3: #{tpu_custom_call.1} parent=1 // loop_header
      %s16 = sphi 0, %s20
      %p17 = scmp.ge.s32.totalorder %s16, 4
      %s26 = sphi 0, %s28
      %s29 = sphi 0, %s26
      %s30 = sphi 0, %s29
      %s46 = sphi 0, %s30
      %s50 = sphi 0, %s50
      %s52 = sphi 0, %s50
      %s53 = sphi 0, %s52
      %s67 = sphi 0, %s53
      %s71 = sphi 0, %s71
      %s73 = sphi 0, %s71
      %s74 = sphi 0, %s73
      %s88 = sphi 0, %s74
      %s92 = sphi 0, %s92
      %s94 = sphi 0, %s92
      %s95 = sphi 0, %s94
      %s109 = sphi 0, %s95
      %s113 = sphi 0, %s113
      %s115 = sphi 0, %s113
      %s116 = sphi 0, %s115
      %s130 = sphi 0, %s116
      %s134 = sphi 0, %s134
      %s136 = sphi 0, %s134
      %s137 = sphi 0, %s136
      %s151 = sphi 0, %s137
      %s155 = sphi 0, %s155
      %s157 = sphi 0, %s155
      %s158 = sphi 0, %s157
      %s172 = sphi 0, %s158
      %s178 = sphi 0, %s180
      %s181 = sphi 0, %s178
      %s182 = sphi 0, %s181
      %s198 = sphi 0, %s182
    $region4: #{tpu_custom_call.1} parent=1 // loop_header_branch
      %19 = sbr.rel (%p17) target = $region8
    $region5: #{tpu_custom_call.1} parent=1 // loop_body
      %s21 = ssub.s32 %s16, 1
      %s22 = ssub.s32 %s16, 2
      %s23 = sadd.s32 %s16, 1
      %s24 = ssub.s32 %s16, %s23
      %p25 = scmp.eq.s32.totalorder %s24, 0
      %s27 = sadd.s32 %s26, 1
      %s28 = scalar_select %p25, %s26, %s27
      %p31 = pneg %p25
      %p32 = scmp.eq.s32.totalorder %s16, 1
      %p33 = por %p31, %p32
      %p34 = scmp.ne.s32.totalorder %s26, %s29
      %p35 = scmp.eq.s32.totalorder %s16, 0
      %p36 = por %p34, %p35
      %p37 = scmp.ne.s32.totalorder %s26, %s29
      %p38 = scmp.eq.s32.totalorder %s21, 1
      %p39 = por %p37, %p38
      %p40 = scmp.ne.s32.totalorder %s29, %s30
      %p41 = scmp.eq.s32.totalorder %s21, 0
      %p42 = por %p40, %p41
      %p43 = scmp.ne.s32.totalorder %s29, %s30
      %p44 = scmp.eq.s32.totalorder %s22, 1
      %p45 = por %p43, %p44
      %p47 = scmp.ne.s32.totalorder %s30, %s46
      %p48 = scmp.eq.s32.totalorder %s22, 0
      %p49 = por %p47, %p48
      %s51 = sadd.s32 %s50, 1
      %p54 = scmp.eq.s32.totalorder %s16, 1
      %p55 = scmp.ne.s32.totalorder %s50, %s52
      %p56 = scmp.eq.s32.totalorder %s16, 0
      %p57 = por %p55, %p56
      %p58 = scmp.ne.s32.totalorder %s50, %s52
      %p59 = scmp.eq.s32.totalorder %s21, 1
      %p60 = por %p58, %p59
      %p61 = scmp.ne.s32.totalorder %s52, %s53
      %p62 = scmp.eq.s32.totalorder %s21, 0
      %p63 = por %p61, %p62
      %p64 = scmp.ne.s32.totalorder %s52, %s53
      %p65 = scmp.eq.s32.totalorder %s22, 1
      %p66 = por %p64, %p65
      %p68 = scmp.ne.s32.totalorder %s53, %s67
      %p69 = scmp.eq.s32.totalorder %s22, 0
      %p70 = por %p68, %p69
      %s72 = sadd.s32 %s71, 1
      %p75 = scmp.eq.s32.totalorder %s16, 1
      %p76 = scmp.ne.s32.totalorder %s71, %s73
      %p77 = scmp.eq.s32.totalorder %s16, 0
      %p78 = por %p76, %p77
      %p79 = scmp.ne.s32.totalorder %s71, %s73
      %p80 = scmp.eq.s32.totalorder %s21, 1
      %p81 = por %p79, %p80
      %p82 = scmp.ne.s32.totalorder %s73, %s74
      %p83 = scmp.eq.s32.totalorder %s21, 0
      %p84 = por %p82, %p83
      %p85 = scmp.ne.s32.totalorder %s73, %s74
      %p86 = scmp.eq.s32.totalorder %s22, 1
      %p87 = por %p85, %p86
      %p89 = scmp.ne.s32.totalorder %s74, %s88
      %p90 = scmp.eq.s32.totalorder %s22, 0
      %p91 = por %p89, %p90
      %s93 = sadd.s32 %s92, 1
      %p96 = scmp.eq.s32.totalorder %s16, 1
      %p97 = scmp.ne.s32.totalorder %s92, %s94
      %p98 = scmp.eq.s32.totalorder %s16, 0
      %p99 = por %p97, %p98
      %p100 = scmp.ne.s32.totalorder %s92, %s94
      %p101 = scmp.eq.s32.totalorder %s21, 1
      %p102 = por %p100, %p101
      %p103 = scmp.ne.s32.totalorder %s94, %s95
      %p104 = scmp.eq.s32.totalorder %s21, 0
      %p105 = por %p103, %p104
      %p106 = scmp.ne.s32.totalorder %s94, %s95
      %p107 = scmp.eq.s32.totalorder %s22, 1
      %p108 = por %p106, %p107
      %p110 = scmp.ne.s32.totalorder %s95, %s109
      %p111 = scmp.eq.s32.totalorder %s22, 0
      %p112 = por %p110, %p111
      %s114 = sadd.s32 %s113, 1
      %p117 = scmp.eq.s32.totalorder %s16, 1
      %p118 = scmp.ne.s32.totalorder %s113, %s115
      %p119 = scmp.eq.s32.totalorder %s16, 0
      %p120 = por %p118, %p119
      %p121 = scmp.ne.s32.totalorder %s113, %s115
      %p122 = scmp.eq.s32.totalorder %s21, 1
      %p123 = por %p121, %p122
      %p124 = scmp.ne.s32.totalorder %s115, %s116
      %p125 = scmp.eq.s32.totalorder %s21, 0
      %p126 = por %p124, %p125
      %p127 = scmp.ne.s32.totalorder %s115, %s116
      %p128 = scmp.eq.s32.totalorder %s22, 1
      %p129 = por %p127, %p128
      %p131 = scmp.ne.s32.totalorder %s116, %s130
      %p132 = scmp.eq.s32.totalorder %s22, 0
      %p133 = por %p131, %p132
      %s135 = sadd.s32 %s134, 1
      %p138 = scmp.eq.s32.totalorder %s16, 1
      %p139 = scmp.ne.s32.totalorder %s134, %s136
      %p140 = scmp.eq.s32.totalorder %s16, 0
      %p141 = por %p139, %p140
      %p142 = scmp.ne.s32.totalorder %s134, %s136
      %p143 = scmp.eq.s32.totalorder %s21, 1
      %p144 = por %p142, %p143
      %p145 = scmp.ne.s32.totalorder %s136, %s137
      %p146 = scmp.eq.s32.totalorder %s21, 0
      %p147 = por %p145, %p146
      %p148 = scmp.ne.s32.totalorder %s136, %s137
      %p149 = scmp.eq.s32.totalorder %s22, 1
      %p150 = por %p148, %p149
      %p152 = scmp.ne.s32.totalorder %s137, %s151
      %p153 = scmp.eq.s32.totalorder %s22, 0
      %p154 = por %p152, %p153
      %s156 = sadd.s32 %s155, 1
      %p159 = scmp.eq.s32.totalorder %s16, 1
      %p160 = scmp.ne.s32.totalorder %s155, %s157
      %p161 = scmp.eq.s32.totalorder %s16, 0
      %p162 = por %p160, %p161
      %p163 = scmp.ne.s32.totalorder %s155, %s157
      %p164 = scmp.eq.s32.totalorder %s21, 1
      %p165 = por %p163, %p164
      %p166 = scmp.ne.s32.totalorder %s157, %s158
      %p167 = scmp.eq.s32.totalorder %s21, 0
      %p168 = por %p166, %p167
      %p169 = scmp.ne.s32.totalorder %s157, %s158
      %p170 = scmp.eq.s32.totalorder %s22, 1
      %p171 = por %p169, %p170
      %p173 = scmp.ne.s32.totalorder %s158, %s172
      %p174 = scmp.eq.s32.totalorder %s22, 0
      %p175 = por %p173, %p174
      %s176 = ssub.s32 %s16, %s23
      %p177 = scmp.eq.s32.totalorder %s176, 0
      %s179 = sadd.s32 %s178, 1
      %s180 = scalar_select %p177, %s178, %s179
      %p183 = pneg %p177
      %p184 = scmp.eq.s32.totalorder %s16, 1
      %p185 = por %p183, %p184
      %p186 = scmp.ne.s32.totalorder %s178, %s181
      %p187 = scmp.eq.s32.totalorder %s16, 0
      %p188 = por %p186, %p187
      %p189 = scmp.ne.s32.totalorder %s178, %s181
      %p190 = scmp.eq.s32.totalorder %s21, 1
      %p191 = por %p189, %p190
      %p192 = scmp.ne.s32.totalorder %s181, %s182
      %p193 = scmp.eq.s32.totalorder %s21, 0
      %p194 = por %p192, %p193
      %p195 = scmp.ne.s32.totalorder %s181, %s182
      %p196 = scmp.eq.s32.totalorder %s22, 1
      %p197 = por %p195, %p196
      %p199 = scmp.ne.s32.totalorder %s182, %s198
      %p200 = scmp.eq.s32.totalorder %s22, 0
      %p201 = por %p199, %p200
      %p202 = scmp.le.s32.totalorder 1, %s16
      %p203 = scmp.lt.s32.totalorder %s16, 3
      %p204 = pnand %p202, %p203
      %p205 = pneg %p204
      // Predicated region
      $region9: #{tpu_custom_call.1} parent=5 // pred_check
        _
      $region10: #{tpu_custom_call.1} parent=5 // pred_check_branch
        %207 = sbr.rel (%p204) target = $region12
      $region11: #{tpu_custom_call.1} parent=5 // pred_region
        %s208 = ssub.s32 %s16, 1
        // Predicated region
        $region13: #{tpu_custom_call.1} parent=11 // pred_check
          %p209 = pneg %p63
        $region14: #{tpu_custom_call.1} parent=11 // pred_check_branch
          %211 = sbr.rel (%p209) target = $region16
        $region15: #{tpu_custom_call.1} parent=11 // pred_region
          _
        $region16: #{tpu_custom_call.1} parent=11 // pred_fallthru
          _
        // Predicated region
        $region17: #{tpu_custom_call.1} parent=11 // pred_check
          %p212 = pneg %p84
        $region18: #{tpu_custom_call.1} parent=11 // pred_check_branch
          %214 = sbr.rel (%p212) target = $region20
        $region19: #{tpu_custom_call.1} parent=11 // pred_region
          _
        $region20: #{tpu_custom_call.1} parent=11 // pred_fallthru
          _
        // Predicated region
        $region21: #{tpu_custom_call.1} parent=11 // pred_check
          %p215 = pneg %p105
        $region22: #{tpu_custom_call.1} parent=11 // pred_check_branch
          %217 = sbr.rel (%p215) target = $region24
        $region23: #{tpu_custom_call.1} parent=11 // pred_region
          _
        $region24: #{tpu_custom_call.1} parent=11 // pred_fallthru
          _
        // Predicated region
        $region25: #{tpu_custom_call.1} parent=11 // pred_check
          %p218 = pneg %p126
        $region26: #{tpu_custom_call.1} parent=11 // pred_check_branch
          %220 = sbr.rel (%p218) target = $region28
        $region27: #{tpu_custom_call.1} parent=11 // pred_region
          _
        $region28: #{tpu_custom_call.1} parent=11 // pred_fallthru
          _
        // Predicated region
        $region29: #{tpu_custom_call.1} parent=11 // pred_check
          %p221 = pneg %p147
        $region30: #{tpu_custom_call.1} parent=11 // pred_check_branch
          %223 = sbr.rel (%p221) target = $region32
        $region31: #{tpu_custom_call.1} parent=11 // pred_region
          _
        $region32: #{tpu_custom_call.1} parent=11 // pred_fallthru
          _
        // Predicated region
        $region33: #{tpu_custom_call.1} parent=11 // pred_check
          %p224 = pneg %p168
        $region34: #{tpu_custom_call.1} parent=11 // pred_check_branch
          %226 = sbr.rel (%p224) target = $region36
        $region35: #{tpu_custom_call.1} parent=11 // pred_region
          _
        $region36: #{tpu_custom_call.1} parent=11 // pred_fallthru
          _
      $region12: #{tpu_custom_call.1} parent=5 // pred_fallthru
        _
      %p227 = scmp.lt.s32.totalorder %s16, 2
      // Predicated region
      $region37: #{tpu_custom_call.1} parent=5 // pred_check
        %p228 = pneg %p227
      $region38: #{tpu_custom_call.1} parent=5 // pred_check_branch
        %230 = sbr.rel (%p228) target = $region40
      $region39: #{tpu_custom_call.1} parent=5 // pred_region
        // Predicated region
        $region41: #{tpu_custom_call.1} parent=39 // pred_check
          %p231 = pneg %p36
        $region42: #{tpu_custom_call.1} parent=39 // pred_check_branch
          %233 = sbr.rel (%p231) target = $region44
        $region43: #{tpu_custom_call.1} parent=39 // pred_region
          %p234 = scmp.lt.s32.totalorder %s16, 1
          %s235 = scalar_select %p234, %s16, 1
          %s236 = smul.addr %s235, 3
          %s237 = smul.addr %s236, 4
          %s238 = scalar_lea.vmem %s0, %s237
        $region44: #{tpu_custom_call.1} parent=39 // pred_fallthru
          _
      $region40: #{tpu_custom_call.1} parent=5 // pred_fallthru
        _
      %p239 = scmp.le.s32.totalorder 1, %s16
      %p240 = scmp.lt.s32.totalorder %s16, 3
      %p241 = pnand %p239, %p240
      %p242 = pneg %p241
      // Predicated region
      $region45: #{tpu_custom_call.1} parent=5 // pred_check
        _
      $region46: #{tpu_custom_call.1} parent=5 // pred_check_branch
        %244 = sbr.rel (%p241) target = $region48
      $region47: #{tpu_custom_call.1} parent=5 // pred_region
        %s245 = ssub.s32 %s16, 1
        %p246 = scmp.lt.s32.totalorder %s21, 1
        %s247 = scalar_select %p246, %s21, 1
        %s248 = smul.addr %s247, 3
        %s249 = smul.addr %s248, 4
        %s250 = scalar_lea.vmem %s0, %s249
        %p251 = pneg %p42
        %p252 = pneg %p39
        %p253 = pneg %p63
        %p254 = pneg %p60
        %p255 = pneg %p84
        %p256 = pneg %p81
        %p257 = pneg %p105
        %p258 = pneg %p102
        %p259 = pneg %p126
        %p260 = pneg %p123
        %p261 = pneg %p147
        %p262 = pneg %p144
        %p263 = pneg %p168
        %p264 = pneg %p165
        %p265 = pneg %p194
        %p266 = pneg %p191
        %s267 = sand.u32 %s181, 1
        %s268 = scalar_lea.sflag [#allocation3], %s267
        %s269 = sand.u32 %s181, 1
        %s270 = smul.addr %s269, 8
        %s271 = scalar_lea.vmem [#allocation2], %s270
        %p272 = scmp.lt.s32.totalorder %s21, 1
        %s273 = scalar_select %p272, %s21, 1
        %s274 = smul.addr %s273, 3
        %s275 = smul.addr %s274, 4
        %s276 = scalar_lea.vmem %s0, %s275
        %v278 = vld [vmem:[%s276] sm:$0xf]
        %v279 = vld [vmem:[%s276 + $0x4] sm:$0xf]
        %v280 = vld [vmem:[%s276 + $0x8] sm:$0x3]
        %v283 = vunpack.c.l.b16 %v278
        %v284 = vunpack.c.l.b16 %v279
        %v285 = vpack.c.b16 %v284, %v283
        %v287 = vunpack.c.l.b16 %v280
        %v288 = vpack.c.b16 %v287, %v287
        %vm289 = vcmask 1046528
        %v290 = vrot.slane %v285, 1
        %v291 = vrot.slane %v288, 1
        %v292 = vsel %vm289, %v290, %v291
        %293 = vrot.lane.b32.xlu0 %v292, 4
        %v294 = vpop.permute.xlu0 %293
        %vm295 = vcmask 1045504
        %v296 = vrot.slane %v285, 2
        %v297 = vrot.slane %v288, 2
        %v298 = vsel %vm295, %v296, %v297
        %299 = vrot.lane.b32.xlu0 %v298, 8
        %v300 = vpop.permute.xlu0 %299
        %vm301 = vcmask 31744
        %v304 = vsel %vm301, %v285, %v294
        %vm305 = vcmask 64512
        %v307 = vsel %vm305, %v304, %v300
        %v308 = vld [vmem:[%s1] sm:$0xf]
        %v309 = vld [vmem:[%s1 + $0x4] sm:$0x3]
        %v310 = vld [vmem:[%s2] sm:$0x1]
        %v312 = vlaneseq
        %v313 = vshrl.u32 %v312, 7
        %v314 = vsub.s32 0, %v313
        %v315 = vrot.slane %v310, %v314
        %v319 = vunpack.c.l.b16 %v308
        %v320 = vunpack.c.l.b16 %v309
        %v321 = vpack.c.b16 %v320, %v319
        %vm322 = vcmask 97280
        %v323 = vsel %vm322, %v307, 0
        %vm325 = vcmask 1045504
        %v327 = vsel %vm325, %v321, 0
        %329 = vmatprep.subr.bf16.mxu0 0
        %330 = vmatpush1.bf16.msra.mxu0 %v327
        %331 = vmatprep.subr.bf16.mxu0 0
        %332 = vmatpush1.bf16.msra.mxu0 0
        %333 = vmatprep.subr.bf16.mxu0 0
        %334 = vmatpush1.bf16.msra.mxu0 0
        %335 = vmatprep.subr.bf16.mxu0 0
        %336 = vmatpush1.bf16.msra.mxu0 0
        %337 = vmatprep.subr.bf16.mxu0 0
        %338 = vmatpush1.bf16.msra.mxu0 0
        %339 = vmatprep.subr.bf16.mxu0 0
        %340 = vmatpush1.bf16.msra.mxu0 0
        %341 = vmatprep.subr.bf16.mxu0 0
        %342 = vmatpush1.bf16.msra.mxu0 0
        %343 = vmatprep.subr.bf16.mxu0 0
        %344 = vmatpush1.bf16.msra.mxu0 0
        %345 = vmatprep.subr.bf16.mxu0 0
        %346 = vmatpush1.bf16.msra.mxu0 0
        %347 = vmatprep.subr.bf16.mxu0 0
        %348 = vmatpush1.bf16.msra.mxu0 0
        %349 = vmatprep.subr.bf16.mxu0 0
        %350 = vmatpush1.bf16.msra.mxu0 0
        %351 = vmatprep.subr.bf16.mxu0 0
        %352 = vmatpush1.bf16.msra.mxu0 0
        %353 = vmatprep.subr.bf16.mxu0 0
        %354 = vmatpush1.bf16.msra.mxu0 0
        %355 = vmatprep.subr.bf16.mxu0 0
        %356 = vmatpush1.bf16.msra.mxu0 0
        %357 = vmatprep.subr.bf16.mxu0 0
        %358 = vmatpush1.bf16.msra.mxu0 0
        %359 = vmatprep.subr.bf16.mxu0 0
        %360 = vmatpush1.bf16.msra.mxu0 0
        %361 = vmatprep.mubr.bf16.mxu0 0
        %362 = vmatmul.mubr.bf16.gmra.mrb[0].mxu0 %v323
        %v363 = vpop.f32.mrb[0].mxu0
        %v364 = vadd.f32 %v315, %v363
        %v365 = vpop.f32.mrb[0].mxu0
        %v366 = vpop.f32.mrb[0].mxu0
        %v367 = vadd.f32 %v315, %v366
        %v368 = vpop.f32.mrb[0].mxu0
        %369 = vdwg.mxu0
        %v370 = vmax.f32 %v364, 0.0
        %v371 = vmax.f32 %v367, 0.0
        %v372 = vpack.c.bf16 %v371, %v370
        %v374 = vrot.slane %v372, 6
        %vm375 = vcmask 1041408
        %v378 = vsel %vm375, 0, %v374
        %v380 = vrot.slane %v378, 1
        %v381 = vrot.slane %v374, 1
        %v382 = vsel %vm289, %v380, %v381
        %383 = vrot.lane.b32.xlu0 %v382, 8
        %v384 = vpop.permute.xlu0 %383
        %v385 = vrot.slane %v378, 2
        %v386 = vrot.slane %v374, 2
        %v387 = vsel %vm295, %v385, %v386
        %388 = vrot.lane.b32.xlu0 %v387, 16
        %v389 = vpop.permute.xlu0 %388
        %v391 = vsel %vm305, %v378, %v384
        %vm392 = vcmask 130048
        %v394 = vsel %vm392, %v391, %v389
        %v395 = vld [vmem:[%s3] sm:$0xf]
        %v396 = vld [vmem:[%s3 + $0x4] sm:$0xf]
        %v397 = vld [vmem:[%s3 + $0x8] sm:$0xf]
        %v398 = vld [vmem:[%s4] sm:$0x1]
        %v400 = vlaneseq
        %v401 = vshrl.u32 %v400, 7
        %v402 = vsub.s32 0, %v401
        %v403 = vrot.slane %v398, %v402
        %v408 = vunpack.c.l.b16 %v395
        %v409 = vunpack.c.l.b16 %v396
        %v410 = vunpack.c.l.b16 %v397
        %v411 = vpack.c.b16 %v409, %v408
        %v412 = vpack.c.b16 %v410, %v410
        %vm414 = vcmask 195584
        %v415 = vsel %vm414, %v394, 0
        %vm417 = vcmask 1043456
        %v419 = vsel %vm417, %v412, 0
        %421 = vmatprep.subr.bf16.mxu0 0
        %422 = vmatpush1.bf16.msra.mxu0 %v411
        %423 = vmatprep.subr.bf16.mxu0 0
        %424 = vmatpush1.bf16.msra.mxu0 %v419
        %425 = vmatprep.subr.bf16.mxu0 0
        %426 = vmatpush1.bf16.msra.mxu0 0
        %427 = vmatprep.subr.bf16.mxu0 0
        %428 = vmatpush1.bf16.msra.mxu0 0
        %429 = vmatprep.subr.bf16.mxu0 0
        %430 = vmatpush1.bf16.msra.mxu0 0
        %431 = vmatprep.subr.bf16.mxu0 0
        %432 = vmatpush1.bf16.msra.mxu0 0
        %433 = vmatprep.subr.bf16.mxu0 0
        %434 = vmatpush1.bf16.msra.mxu0 0
        %435 = vmatprep.subr.bf16.mxu0 0
        %436 = vmatpush1.bf16.msra.mxu0 0
        %437 = vmatprep.subr.bf16.mxu0 0
        %438 = vmatpush1.bf16.msra.mxu0 0
        %439 = vmatprep.subr.bf16.mxu0 0
        %440 = vmatpush1.bf16.msra.mxu0 0
        %441 = vmatprep.subr.bf16.mxu0 0
        %442 = vmatpush1.bf16.msra.mxu0 0
        %443 = vmatprep.subr.bf16.mxu0 0
        %444 = vmatpush1.bf16.msra.mxu0 0
        %445 = vmatprep.subr.bf16.mxu0 0
        %446 = vmatpush1.bf16.msra.mxu0 0
        %447 = vmatprep.subr.bf16.mxu0 0
        %448 = vmatpush1.bf16.msra.mxu0 0
        %449 = vmatprep.subr.bf16.mxu0 0
        %450 = vmatpush1.bf16.msra.mxu0 0
        %451 = vmatprep.subr.bf16.mxu0 0
        %452 = vmatpush1.bf16.msra.mxu0 0
        %453 = vmatprep.mubr.bf16.mxu0 0
        %454 = vmatmul.mubr.bf16.gmra.mrb[0].mxu0 %v415
        %v455 = vpop.f32.mrb[0].mxu0
        %v456 = vadd.f32 %v403, %v455
        %v457 = vpop.f32.mrb[0].mxu0
        %v458 = vpop.f32.mrb[0].mxu0
        %v459 = vadd.f32 %v403, %v458
        %v460 = vpop.f32.mrb[0].mxu0
        %461 = vdwg.mxu0
        %v462 = vmax.f32 %v456, 0.0
        %v463 = vmax.f32 %v459, 0.0
        %v464 = vld [vmem:[%s5] sm:$0x3]
        %v465 = vld [vmem:[%s6] sm:$0x1]
        %v467 = vlaneseq
        %v468 = vshrl.u32 %v467, 7
        %v469 = vsub.s32 0, %v468
        %v470 = vrot.slane %v465, %v469
        %v473 = vsel %vm301, %v298, 0
        %v476 = vsel %vm375, %v464, 0
        %478 = vmatprep.subr.bf16.mxu0 0
        %479 = vmatpush1.bf16.msra.mxu0 %v476
        %480 = vmatprep.subr.bf16.mxu0 0
        %481 = vmatpush1.bf16.msra.mxu0 0
        %482 = vmatprep.subr.bf16.mxu0 0
        %483 = vmatpush1.bf16.msra.mxu0 0
        %484 = vmatprep.subr.bf16.mxu0 0
        %485 = vmatpush1.bf16.msra.mxu0 0
        %486 = vmatprep.subr.bf16.mxu0 0
        %487 = vmatpush1.bf16.msra.mxu0 0
        %488 = vmatprep.subr.bf16.mxu0 0
        %489 = vmatpush1.bf16.msra.mxu0 0
        %490 = vmatprep.subr.bf16.mxu0 0
        %491 = vmatpush1.bf16.msra.mxu0 0
        %492 = vmatprep.subr.bf16.mxu0 0
        %493 = vmatpush1.bf16.msra.mxu0 0
        %494 = vmatprep.subr.bf16.mxu0 0
        %495 = vmatpush1.bf16.msra.mxu0 0
        %496 = vmatprep.subr.bf16.mxu0 0
        %497 = vmatpush1.bf16.msra.mxu0 0
        %498 = vmatprep.subr.bf16.mxu0 0
        %499 = vmatpush1.bf16.msra.mxu0 0
        %500 = vmatprep.subr.bf16.mxu0 0
        %501 = vmatpush1.bf16.msra.mxu0 0
        %502 = vmatprep.subr.bf16.mxu0 0
        %503 = vmatpush1.bf16.msra.mxu0 0
        %504 = vmatprep.subr.bf16.mxu0 0
        %505 = vmatpush1.bf16.msra.mxu0 0
        %506 = vmatprep.subr.bf16.mxu0 0
        %507 = vmatpush1.bf16.msra.mxu0 0
        %508 = vmatprep.subr.bf16.mxu0 0
        %509 = vmatpush1.bf16.msra.mxu0 0
        %510 = vmatprep.mubr.bf16.mxu0 0
        %511 = vmatmul.mubr.bf16.gmra.mrb[0].mxu0 %v473
        %v512 = vpop.f32.mrb[0].mxu0
        %v513 = vadd.f32 %v470, %v512
        %v514 = vpop.f32.mrb[0].mxu0
        %v515 = vpop.f32.mrb[0].mxu0
        %v516 = vadd.f32 %v470, %v515
        %v517 = vpop.f32.mrb[0].mxu0
        %518 = vdwg.mxu0
        %v519 = vadd.f32 %v462, %v513
        %v520 = vadd.f32 %v463, %v516
        %v521 = vmax.f32 %v519, 0.0
        %v522 = vmax.f32 %v520, 0.0
        %523 = vxpose.xlu0.b32.start [1/16] %v521, 128
        %524 = vxpose.xlu0.b32.cont [2/16] %v522, 128
        %525 = vxpose.xlu0.b32.cont [3/16] 0.0, 128
        %526 = vxpose.xlu0.b32.cont [4/16] 0.0, 128
        %527 = vxpose.xlu0.b32.cont [5/16] 0.0, 128
        %528 = vxpose.xlu0.b32.cont [6/16] 0.0, 128
        %529 = vxpose.xlu0.b32.cont [7/16] 0.0, 128
        %530 = vxpose.xlu0.b32.cont [8/16] 0.0, 128
        %531 = vxpose.xlu0.b32.cont [9/16] 0.0, 128
        %532 = vxpose.xlu0.b32.cont [10/16] 0.0, 128
        %533 = vxpose.xlu0.b32.cont [11/16] 0.0, 128
        %534 = vxpose.xlu0.b32.cont [12/16] 0.0, 128
        %535 = vxpose.xlu0.b32.cont [13/16] 0.0, 128
        %536 = vxpose.xlu0.b32.cont [14/16] 0.0, 128
        %537 = vxpose.xlu0.b32.cont [15/16] 0.0, 128
        %538 = vxpose.xlu0.b32.end [16/16] 0.0, 128
        %v539 = vpop.trf.xlu0
        %v540 = vpop.trf.xlu0
        %v541 = vpop.trf.xlu0
        %v542 = vpop.trf.xlu0
        %v543 = vpop.trf.xlu0
        %v544 = vpop.trf.xlu0
        %v545 = vpop.trf.xlu0
        %v546 = vpop.trf.xlu0
        %v547 = vpop.trf.xlu0
        %v548 = vpop.trf.xlu0
        %v549 = vpop.trf.xlu0
        %v550 = vpop.trf.xlu0
        %v551 = vpop.trf.xlu0
        %v552 = vpop.trf.xlu0
        %v553 = vpop.trf.xlu0
        %v554 = vpop.trf.xlu0
        %555 = vst.msk [vmem:[%s271] sm:$0xff] %vm392, %v539
        %s556 = sand.u32 %s181, 1
        %s557 = scalar_lea.sflag [#allocation3], %s556
        %s558 = sand.u32 %s181, 1
        %s559 = smul.addr %s558, 8
        %s560 = scalar_lea.vmem [#allocation2], %s559
        // Predicated region
        $region49: #{tpu_custom_call.1} parent=47 // pred_check
          %p561 = pneg %p191
        $region50: #{tpu_custom_call.1} parent=47 // pred_check_branch
          %563 = sbr.rel (%p561) target = $region52
        $region51: #{tpu_custom_call.1} parent=47 // pred_region
          %s565 = ssub.s32 128, 128
          %566 = vsyncadd %s557, %s565
          %s567 = smul.addr %s21, 128
          %s568 = scalar_lea.hbm %s7, %s567
          %s570 = sshll.u32 %s560, 4
          %s571 = int_to_ptr.vmem [resolvable:$true] %s570
          %573 = dma.vmem_to_hbm [thread:$0]  %s571, 128, %s568, %s557
        $region52: #{tpu_custom_call.1} parent=47 // pred_fallthru
          _
      $region48: #{tpu_custom_call.1} parent=5 // pred_fallthru
        _
      %p574 = scmp.le.s32.totalorder 2, %s16
      // Predicated region
      $region53: #{tpu_custom_call.1} parent=5 // pred_check
        %p575 = pneg %p574
      $region54: #{tpu_custom_call.1} parent=5 // pred_check_branch
        %577 = sbr.rel (%p575) target = $region56
      $region55: #{tpu_custom_call.1} parent=5 // pred_region
        %s578 = ssub.s32 %s16, 2
        // Predicated region
        $region57: #{tpu_custom_call.1} parent=55 // pred_check
          %p579 = pneg %p197
        $region58: #{tpu_custom_call.1} parent=55 // pred_check_branch
          %581 = sbr.rel (%p579) target = $region60
        $region59: #{tpu_custom_call.1} parent=55 // pred_region
          %s582 = sand.u32 %s182, 1
          %s583 = scalar_lea.sflag [#allocation3], %s582
          %s584 = sand.u32 %s182, 1
          %s585 = smul.addr %s584, 8
          %s586 = scalar_lea.vmem [#allocation2], %s585
          %587 = dma.done %s583, 128
        $region60: #{tpu_custom_call.1} parent=55 // pred_fallthru
          _
      $region56: #{tpu_custom_call.1} parent=5 // pred_fallthru
        _
    $region6: #{tpu_custom_call.1} parent=1 // loop_footer
      %s20 = sadd.s32 1, %s16
    $region7: #{tpu_custom_call.1} parent=1 // loop_footer_branch
      %15 = sbr.rel target = $region3
    $region8: #{tpu_custom_call.1} parent=1 // loop_exit
      _
    %588 = vsyncpa [#allocation3], 1
    %s589 = scalar_lea.sflag [#allocation3], 1
    %590 = vsyncpa %s589, 1

</llo_original>
